<compile_context>
chip_gen: v6e
topology: v6e:2x2x1
jax: 0.10.0
libtpu: 0.0.40
codegen_flags: <defaults>
</compile_context>

<pallas_src>
import jax
import jax.numpy as jnp
from jax.experimental import pallas as pl
from jax.experimental.pallas import tpu as pltpu

LANE = 128
BLOCK_BYTES = 4 * 1024 * 1024          # per-input, per-block HBM->VMEM tile
VMEM_LIMIT_BYTES = 48 * 1024 * 1024    # 2 inputs x 2 buffers x 4 MiB + headroom; < v7x 64 MiB
ACC_ROWS_MAX = 64                      # widened accumulator -> 8 independent f32 add chains


def _round_up(a, b):
    return (a + b - 1) // b * b


def _detect_tensorcores():
    """Best-effort TensorCores-per-chip. Returns None when it cannot be determined."""
    try:
        info = pltpu.get_tpu_info()
    except Exception:
        return None
    for name in ("tensorcores_per_chip", "num_tensorcores", "tensorcore_count", "tc_count"):
        v = getattr(info, name, None)
        if isinstance(v, int) and v >= 1:
            return v
    return None


def _l1_l2_kernel(scal_ref, nrows_ref, x_ref, y_ref, out_ref, acc_ref):
    c = pl.program_id(0)                 # core-split axis
    i = pl.program_id(1)                 # block axis within this core
    n_inner = pl.num_programs(1)

    @pl.when(i == 0)
    def _():
        acc_ref[...] = jnp.zeros_like(acc_ref)

    # Scalars precomputed in the wrapper (SMEM): no per-step divide/reciprocal.
    p = scal_ref[0]
    inv_2p = scal_ref[1]
    half_p = scal_ref[2]

    block_rows, lane = x_ref.shape       # static Python ints
    acc_rows, _ = acc_ref.shape          # static
    g = block_rows // acc_rows           # slabs per block

    # Global block index.  The index_map clamps out-of-range blocks onto the
    # last real block; the row mask below zeroes their contribution.
    gidx = c * n_inner + i
    rem_rows = nrows_ref[0] - gidx * block_rows   # valid rows in this block
    is_full = rem_rows >= block_rows

    def slab(k):
        r0 = pl.multiple_of(k * acc_rows, acc_rows)
        xs = x_ref[pl.ds(r0, acc_rows), :].astype(jnp.float32)
        ys = y_ref[pl.ds(r0, acc_rows), :].astype(jnp.float32)
        d = xs - ys
        ad = jnp.abs(d)
        # Branches are complementary: |d| if |d| >= p else (d^2 + p^2) / (2p).
        return jnp.where(ad >= p, ad, d * d * inv_2p + half_p)

    zero = jnp.zeros((acc_rows, lane), jnp.float32)

    @pl.when(is_full)
    def _():
        # Interior block: stream slab-by-slab into a vreg-carried accumulator.
        acc_ref[...] += jax.lax.fori_loop(0, g, lambda k, a: a + slab(k), zero)

    @pl.when(jnp.logical_not(is_full))
    def _():
        # Partial / duplicated block: zero out whole invalid rows (row-granular mask).
        base = jax.lax.broadcasted_iota(jnp.int32, (acc_rows, 1), 0)

        def body(k, a):
            keep = (base + k * acc_rows) < rem_rows
            return a + jnp.where(keep, slab(k), 0.0)

        acc_ref[...] += jax.lax.fori_loop(0, g, body, zero)

    @pl.when(i == n_inner - 1)
    def _():
        out_ref[0] = acc_ref[...]        # lane-dense (acc_rows, 128) partials per core


def calculate_l1_l2_distance(x, y, param0, *, block_bytes=BLOCK_BYTES):
    """Pallas equivalent of calculate_L1_L2_distance.forward -> scalar f32."""
    xf = x.reshape(-1)
    yf = y.reshape(-1)
    n = xf.shape[0]

    p = jnp.asarray(param0, jnp.float32) / jnp.float32(255.0)
    inv_2p = jnp.float32(1.0) / (jnp.float32(2.0) * p)
    half_p = jnp.float32(0.5) * p

    # Lane-aligned prefix goes through the kernel; the <128-element tail (if any)
    # is folded in here with a tiny jnp expression (no full-array pad copy).
    n_main = (n // LANE) * LANE
    rows = n_main // LANE

    if n_main != n:
        xt = xf[n_main:].astype(jnp.float32)
        yt = yf[n_main:].astype(jnp.float32)
        dt = xt - yt
        adt = jnp.abs(dt)
        tail_sum = jnp.sum(jnp.where(adt >= p, adt, dt * dt * inv_2p + half_p))
    else:
        tail_sum = jnp.float32(0.0)

    if rows == 0:
        return tail_sum / jnp.float32(n)

    if n_main != n:
        xm = jax.lax.slice(xf, (0,), (n_main,))
        ym = jax.lax.slice(yf, (0,), (n_main,))
    else:
        xm, ym = xf, yf
    x2 = xm.reshape(rows, LANE)
    y2 = ym.reshape(rows, LANE)

    # Sublane granularity of the native tile: (8,128) 32-bit, (16,128) 16-bit, (32,128) 8-bit.
    def gran_of(dt):
        return {1: 32, 2: 16}.get(jnp.dtype(dt).itemsize, 8)

    gran = max(gran_of(x2.dtype), gran_of(y2.dtype))
    bytes_per_row = LANE * max(jnp.dtype(x2.dtype).itemsize, jnp.dtype(y2.dtype).itemsize)
    budget_rows = max(gran, (block_bytes // bytes_per_row) // gran * gran)
    block_rows = min(budget_rows, _round_up(rows, gran))

    acc_rows = 8
    for cand in (ACC_ROWS_MAX, 32, 16, 8):
        if block_rows % cand == 0:
            acc_rows = cand
            break

    nblocks = pl.cdiv(rows, block_rows)

    detected = _detect_tensorcores()
    if detected is None:
        # Unknown chip: keep a 2-wide "parallel" core axis (cheap serial loop of 2
        # on single-TC chips; lets megacore-style runtimes shard it).
        caxis = 2 if nblocks >= 2 else 1
        sem0 = pltpu.PARALLEL
    else:
        caxis = min(detected, 2) if nblocks >= 2 else 1
        sem0 = pltpu.CORE_PARALLEL       # guaranteed two-TC split on v7x
    if caxis == 1:
        sem0 = pltpu.ARBITRARY
    steps = pl.cdiv(nblocks, caxis)

    scal = jnp.stack([p, inv_2p, half_p]).astype(jnp.float32)
    nrows_arr = jnp.asarray(rows, jnp.int32).reshape(1)

    last_block = nblocks - 1

    def in_map(c, i):
        # Clamp extra steps onto the last real block; the kernel's row mask
        # zeroes their contribution.
        return (jnp.minimum(c * steps + i, last_block), 0)

    partial = pl.pallas_call(
        _l1_l2_kernel,
        out_shape=jax.ShapeDtypeStruct((caxis, acc_rows, LANE), jnp.float32),
        grid_spec=pltpu.PrefetchScalarGridSpec(
            num_scalar_prefetch=0,
            grid=(caxis, steps),
            in_specs=[
                pl.BlockSpec(memory_space=pltpu.SMEM),          # [p, 1/(2p), p/2]
                pl.BlockSpec(memory_space=pltpu.SMEM),          # valid row count
                pl.BlockSpec((block_rows, LANE), in_map),
                pl.BlockSpec((block_rows, LANE), in_map),
            ],
            out_specs=pl.BlockSpec((1, acc_rows, LANE), lambda c, i: (c, 0, 0)),
            scratch_shapes=[pltpu.VMEM((acc_rows, LANE), jnp.float32)],
        ),
        compiler_params=pltpu.CompilerParams(
            dimension_semantics=(sem0, pltpu.ARBITRARY),
            vmem_limit_bytes=VMEM_LIMIT_BYTES),
    )(scal, nrows_arr, x2, y2)

    return (jnp.sum(partial) + tail_sum) / jnp.float32(n)


def _reference(x, y, param0):
    xf = x.astype(jnp.float32)
    yf = y.astype(jnp.float32)
    diff = jnp.abs(xf - yf)
    param = jnp.float32(param0) / 255.0
    mask1 = jnp.where(diff >= param, jnp.abs(xf - yf), jnp.zeros_like(xf))
    mask2 = jnp.where(diff < param,
                      ((xf - yf) * (xf - yf) + param * param) / (2.0 * param),
                      jnp.zeros_like(xf))
    return jnp.mean(mask1 + mask2)


if __name__ == "__main__":
    key = jax.random.PRNGKey(0)
    k1, k2, k3, k4, k5, k6, k7, k8 = jax.random.split(key, 8)
    param0 = 30.0

    # 1) Primary NCHW f32 test (element count multiple of 128 -> zero-copy path).
    x = jax.random.uniform(k1, (2, 4, 16, 16), dtype=jnp.float32)
    y = jax.random.uniform(k2, (2, 4, 16, 16), dtype=jnp.float32)
    out = jax.block_until_ready(calculate_l1_l2_distance(x, y, param0))
    ref = _reference(x, y, param0)
    assert jnp.allclose(out, ref, rtol=1e-5, atol=1e-6), (out, ref)

    # 2) Odd-sized f32: exercises the wrapper-side <128-element tail and the
    #    in-kernel row mask on the partial block.
    xo = jax.random.uniform(k3, (3, 5, 7, 11), dtype=jnp.float32)
    yo = jax.random.uniform(k4, (3, 5, 7, 11), dtype=jnp.float32)
    out_o = jax.block_until_ready(calculate_l1_l2_distance(xo, yo, param0))
    ref_o = _reference(xo, yo, param0)
    assert jnp.allclose(out_o, ref_o, rtol=1e-5, atol=1e-6), (out_o, ref_o)

    # 3) Native uint8 images: streamed un-cast (4x fewer HBM bytes), cast in-kernel.
    xu = jax.random.randint(k5, (2, 3, 64, 64), 0, 256, dtype=jnp.int32).astype(jnp.uint8)
    yu = jax.random.randint(k6, (2, 3, 64, 64), 0, 256, dtype=jnp.int32).astype(jnp.uint8)
    out_u = jax.block_until_ready(calculate_l1_l2_distance(xu, yu, param0))
    ref_u = _reference(xu, yu, param0)
    assert jnp.allclose(out_u, ref_u, rtol=1e-4, atol=1e-3), (out_u, ref_u)

    # 4) Multi-block accumulation (small block override): partial last block and
    #    a clamped duplicate block on the core axis.
    xb = jax.random.uniform(k7, (4, 4, 96, 108), dtype=jnp.float32)
    yb = jax.random.uniform(k8, (4, 4, 96, 108), dtype=jnp.float32)
    out_b = jax.block_until_ready(
        calculate_l1_l2_distance(xb, yb, param0, block_bytes=64 * 1024))
    ref_b = _reference(xb, yb, param0)
    assert jnp.allclose(out_b, ref_b, rtol=1e-5, atol=1e-6), (out_b, ref_b)

    print("KERNEL_OK")
</pallas_src>

<mosaic_0001>
module attributes {stable_mosaic.version = 11 : i64} {
  func.func @_l1_l2_kernel(%arg0: i32, %arg1: i32, %arg2: memref<3xf32, #tpu.memory_space<smem>>, %arg3: memref<1xi32, #tpu.memory_space<smem>>, %arg4: memref<16x128xf32, #tpu.memory_space<vmem>>, %arg5: memref<16x128xf32, #tpu.memory_space<vmem>>, %arg6: memref<1x16x128xf32, #tpu.memory_space<vmem>>, %arg7: memref<16x128xf32, #tpu.memory_space<vmem>>) attributes {dimension_semantics = [#tpu.dimension_semantics<arbitrary>, #tpu.dimension_semantics<arbitrary>], iteration_bounds = array<i64: 1, 1>, scalar_prefetch = 0 : i64, scratch_operands = 1 : i64, tpu.core_type = #tpu.core_type<tc>, window_params = [{transform_indices = @transform_0, window_bounds = array<i64: 3>}, {transform_indices = @transform_1, window_bounds = array<i64: 1>}, {transform_indices = @transform_2, window_bounds = array<i64: 16, 128>}, {transform_indices = @transform_3, window_bounds = array<i64: 16, 128>}, {transform_indices = @transform_4, window_bounds = array<i64: 1, 16, 128>}]} {
    %c0_i32 = arith.constant 0 : i32
    %0 = arith.cmpi eq, %arg1, %c0_i32 : i32
    %1 = arith.extui %0 : i1 to i32
    %c0_i32_0 = arith.constant 0 : i32
    %2 = arith.cmpi ne, %1, %c0_i32_0 : i32
    scf.if %2 {
      %cst_7 = arith.constant 0.000000e+00 : f32
      %21 = vector.broadcast %cst_7 : f32 to vector<16x128xf32>
      %c0_8 = arith.constant 0 : index
      %c0_9 = arith.constant 0 : index
      %22 = vector.load %arg7[%c0_8, %c0_9] : memref<16x128xf32, #tpu.memory_space<vmem>>, vector<16x128xf32>
      tpu.vector_store %arg7[%c0_8, %c0_9], %21 {strides = array<i32>} : memref<16x128xf32, #tpu.memory_space<vmem>>, vector<16x128xf32>,
    } else {
    }
    %c0 = arith.constant 0 : index
    %3 = memref.load %arg2[%c0] : memref<3xf32, #tpu.memory_space<smem>>
    %c1 = arith.constant 1 : index
    %4 = memref.load %arg2[%c1] : memref<3xf32, #tpu.memory_space<smem>>
    %c2 = arith.constant 2 : index
    %5 = memref.load %arg2[%c2] : memref<3xf32, #tpu.memory_space<smem>>
    %c1_i32 = arith.constant 1 : i32
    %6 = arith.muli %arg0, %c1_i32 : i32
    %7 = arith.addi %6, %arg1 : i32
    %c0_1 = arith.constant 0 : index
    %8 = memref.load %arg3[%c0_1] : memref<1xi32, #tpu.memory_space<smem>>
    %c16_i32 = arith.constant 16 : i32
    %9 = arith.muli %7, %c16_i32 : i32
    %10 = arith.subi %8, %9 : i32
    %c16_i32_2 = arith.constant 16 : i32
    %11 = arith.cmpi sge, %10, %c16_i32_2 : i32
    %cst = arith.constant 0.000000e+00 : f32
    %12 = vector.broadcast %cst : f32 to vector<16x128xf32>
    %13 = arith.extui %11 : i1 to i32
    %c0_i32_3 = arith.constant 0 : i32
    %14 = arith.cmpi ne, %13, %c0_i32_3 : i32
    scf.if %14 {
      %c0_7 = arith.constant 0 : index
      %c0_8 = arith.constant 0 : index
      %21 = vector.load %arg7[%c0_7, %c0_8] : memref<16x128xf32, #tpu.memory_space<vmem>>, vector<16x128xf32>
      %c0_i32_9 = arith.constant 0 : i32
      %c16_i32_10 = arith.constant 16 : i32
      %22 = arith.muli %c0_i32_9, %c16_i32_10 : i32
      %23 = tpu.assume_multiple %22, 16 : i32
      %24 = arith.index_cast %23 : i32 to index
      %c0_11 = arith.constant 0 : index
      %25 = vector.load %arg4[%24, %c0_11] : memref<16x128xf32, #tpu.memory_space<vmem>>, vector<16x128xf32>
      %26 = arith.index_cast %23 : i32 to index
      %c0_12 = arith.constant 0 : index
      %27 = vector.load %arg5[%26, %c0_12] : memref<16x128xf32, #tpu.memory_space<vmem>>, vector<16x128xf32>
      %28 = arith.subf %25, %27 : vector<16x128xf32>
      %29 = math.absf %28 : vector<16x128xf32>
      %30 = vector.broadcast %3 : f32 to vector<16x128xf32>
      %31 = arith.cmpf oge, %29, %30 : vector<16x128xf32>
      %32 = arith.mulf %28, %28 : vector<16x128xf32>
      %33 = vector.broadcast %4 : f32 to vector<16x128xf32>
      %34 = arith.mulf %32, %33 : vector<16x128xf32>
      %35 = vector.broadcast %5 : f32 to vector<16x128xf32>
      %36 = arith.addf %34, %35 : vector<16x128xf32>
      %37 = arith.select %31, %29, %36 : vector<16x128xi1>, vector<16x128xf32>
      %38 = arith.addf %12, %37 : vector<16x128xf32>
      %c1_i32_13 = arith.constant 1 : i32
      %39 = arith.addf %21, %38 : vector<16x128xf32>
      %c0_14 = arith.constant 0 : index
      %c0_15 = arith.constant 0 : index
      %40 = vector.load %arg7[%c0_14, %c0_15] : memref<16x128xf32, #tpu.memory_space<vmem>>, vector<16x128xf32>
      tpu.vector_store %arg7[%c0_14, %c0_15], %39 {strides = array<i32>} : memref<16x128xf32, #tpu.memory_space<vmem>>, vector<16x128xf32>,
    } else {
    }
    %true = arith.constant true
    %15 = arith.xori %11, %true : i1
    %16 = arith.extui %15 : i1 to i32
    %c0_i32_4 = arith.constant 0 : i32
    %17 = arith.cmpi ne, %16, %c0_i32_4 : i32
    scf.if %17 {
      %21 = tpu.iota {dimensions = array<i32: 0>} : vector<16x1xi32>
      %c0_7 = arith.constant 0 : index
      %c0_8 = arith.constant 0 : index
      %22 = vector.load %arg7[%c0_7, %c0_8] : memref<16x128xf32, #tpu.memory_space<vmem>>, vector<16x128xf32>
      %c0_i32_9 = arith.constant 0 : i32
      %c16_i32_10 = arith.constant 16 : i32
      %23 = arith.muli %c0_i32_9, %c16_i32_10 : i32
      %24 = vector.broadcast %23 : i32 to vector<16x1xi32>
      %25 = arith.addi %21, %24 : vector<16x1xi32>
      %26 = vector.broadcast %10 : i32 to vector<16x1xi32>
      %27 = arith.cmpi slt, %25, %26 : vector<16x1xi32>
      %c16_i32_11 = arith.constant 16 : i32
      %28 = arith.muli %c0_i32_9, %c16_i32_11 : i32
      %29 = tpu.assume_multiple %28, 16 : i32
      %30 = arith.index_cast %29 : i32 to index
      %c0_12 = arith.constant 0 : index
      %31 = vector.load %arg4[%30, %c0_12] : memref<16x128xf32, #tpu.memory_space<vmem>>, vector<16x128xf32>
      %32 = arith.index_cast %29 : i32 to index
      %c0_13 = arith.constant 0 : index
      %33 = vector.load %arg5[%32, %c0_13] : memref<16x128xf32, #tpu.memory_space<vmem>>, vector<16x128xf32>
      %34 = arith.subf %31, %33 : vector<16x128xf32>
      %35 = math.absf %34 : vector<16x128xf32>
      %36 = vector.broadcast %3 : f32 to vector<16x128xf32>
      %37 = arith.cmpf oge, %35, %36 : vector<16x128xf32>
      %38 = arith.mulf %34, %34 : vector<16x128xf32>
      %39 = vector.broadcast %4 : f32 to vector<16x128xf32>
      %40 = arith.mulf %38, %39 : vector<16x128xf32>
      %41 = vector.broadcast %5 : f32 to vector<16x128xf32>
      %42 = arith.addf %40, %41 : vector<16x128xf32>
      %43 = arith.select %37, %35, %42 : vector<16x128xi1>, vector<16x128xf32>
      %cst_14 = arith.constant 0.000000e+00 : f32
      %44 = vector.shape_cast %27 : vector<16x1xi1> to vector<16x1xi1>
      %45 = vector.broadcast %44 : vector<16x1xi1> to vector<16x128xi1>
      %46 = vector.broadcast %cst_14 : f32 to vector<16x128xf32>
      %47 = arith.select %45, %43, %46 : vector<16x128xi1>, vector<16x128xf32>
      %48 = arith.addf %12, %47 : vector<16x128xf32>
      %c1_i32_15 = arith.constant 1 : i32
      %49 = arith.addf %22, %48 : vector<16x128xf32>
      %c0_16 = arith.constant 0 : index
      %c0_17 = arith.constant 0 : index
      %50 = vector.load %arg7[%c0_16, %c0_17] : memref<16x128xf32, #tpu.memory_space<vmem>>, vector<16x128xf32>
      tpu.vector_store %arg7[%c0_16, %c0_17], %49 {strides = array<i32>} : memref<16x128xf32, #tpu.memory_space<vmem>>, vector<16x128xf32>,
    } else {
    }
    %c0_i32_5 = arith.constant 0 : i32
    %18 = arith.cmpi eq, %arg1, %c0_i32_5 : i32
    %19 = arith.extui %18 : i1 to i32
    %c0_i32_6 = arith.constant 0 : i32
    %20 = arith.cmpi ne, %19, %c0_i32_6 : i32
    scf.if %20 {
      %c0_7 = arith.constant 0 : index
      %c0_8 = arith.constant 0 : index
      %21 = vector.load %arg7[%c0_7, %c0_8] : memref<16x128xf32, #tpu.memory_space<vmem>>, vector<16x128xf32>
      %c0_9 = arith.constant 0 : index
      %c0_10 = arith.constant 0 : index
      %c0_11 = arith.constant 0 : index
      %22 = vector.load %arg6[%c0_9, %c0_10, %c0_11] : memref<1x16x128xf32, #tpu.memory_space<vmem>>, vector<1x16x128xf32>
      %23 = vector.shape_cast %22 : vector<1x16x128xf32> to vector<16x128xf32>
      %24 = vector.shape_cast %21 : vector<16x128xf32> to vector<1x16x128xf32>
      tpu.vector_store %arg6[%c0_9, %c0_10, %c0_11], %24 {strides = array<i32>} : memref<1x16x128xf32, #tpu.memory_space<vmem>>, vector<1x16x128xf32>,
    } else {
    }
    return
  }
  func.func @transform_0(%arg0: i32, %arg1: i32) -> i32 {
    %c0_i32 = arith.constant 0 : i32
    %c0_i32_0 = arith.constant 0 : i32
    return %c0_i32 : i32
  }
  func.func @transform_1(%arg0: i32, %arg1: i32) -> i32 {
    %c0_i32 = arith.constant 0 : i32
    %c0_i32_0 = arith.constant 0 : i32
    return %c0_i32 : i32
  }
  func.func @transform_2(%arg0: i32, %arg1: i32) -> (i32, i32) {
    %c1_i32 = arith.constant 1 : i32
    %0 = arith.muli %arg0, %c1_i32 : i32
    %1 = arith.addi %0, %arg1 : i32
    %c0_i32 = arith.constant 0 : i32
    %2 = arith.minsi %1, %c0_i32 : i32
    %c0_i32_0 = arith.constant 0 : i32
    %c0_i32_1 = arith.constant 0 : i32
    return %2, %c0_i32_0 : i32, i32
  }
  func.func @transform_3(%arg0: i32, %arg1: i32) -> (i32, i32) {
    %c1_i32 = arith.constant 1 : i32
    %0 = arith.muli %arg0, %c1_i32 : i32
    %1 = arith.addi %0, %arg1 : i32
    %c0_i32 = arith.constant 0 : i32
    %2 = arith.minsi %1, %c0_i32 : i32
    %c0_i32_0 = arith.constant 0 : i32
    %c0_i32_1 = arith.constant 0 : i32
    return %2, %c0_i32_0 : i32, i32
  }
  func.func @transform_4(%arg0: i32, %arg1: i32) -> (i32, i32, i32) {
    %c0_i32 = arith.constant 0 : i32
    %c0_i32_0 = arith.constant 0 : i32
    %c0_i32_1 = arith.constant 0 : i32
    return %arg0, %c0_i32, %c0_i32_0 : i32, i32, i32
  }
}

</mosaic_0001>

<llo_original>
// kernel: tpu_custom_call.1
$region0: #{tpu_custom_call.1}
  #allocation0 [shape = 'u32[]', space=smem, size = 0x4, offset = 0x4, fixed_abs, tag = 'smem constant byte address 0x4 - core index']
  #allocation1 [shape = 'u32[144,128]{1,0:T(1,128)}', space=vmem, size = 0x12000, scoped, tag = 'internal scratch']
  #allocation2 [shape = 'f32[16,128]{1,0:T(8,128)}', space=vmem, size = 0x2000, scoped, tag = 'scratch operand']
  #allocation3 [shape = 's32[1]{0:T(128)S(6)}', space=smem, size = 0x200, scoped, tag = 'scoped memory for tpu_custom_call.1']
  %s0 = inlined_call_operand.vmem [shape: f32[3], index: 0, kind: input, shape index: {}]
  %s1 = inlined_call_operand.<no memory space> [shape: s32[1], index: 1, kind: input, shape index: {}]
  %s2 = inlined_call_operand.hbm [shape: f32[16,128], index: 2, kind: input, shape index: {}]
  %s3 = inlined_call_operand.hbm [shape: f32[16,128], index: 3, kind: input, shape index: {}]
  %s4 = inlined_call_operand.hbm [shape: f32[1,16,128], index: 4, kind: output, shape index: {}]
  %s5 = sld [smem:[#allocation0]]
  $region54: #{tpu_custom_call.1} parent=0
    _
  %s7 = ssub.s32 1, %s5
  %s8 = scalar_select 0, %s7, %s5
  %9 = sst [smem:[#allocation3]] %s1
  $region1: #{tpu_custom_call.1} parent=0
    #allocation4 [shape = 'u8[512]{0}', space=smem, size = 0x200, scoped, tag = 'input window, operand 0, single buffered']
    #allocation5 [shape = 's32[1]{0}', space=sflag, size = 0x4, scoped, tag = 'scoped memory for tpu_custom_call.1']
    #allocation6 [shape = 's32[1]{0}', space=sflag, size = 0x4, scoped, tag = 'scoped memory for tpu_custom_call.1']
    #allocation7 [shape = 's32[1]{0}', space=sflag, size = 0x4, scoped, tag = 'scoped memory for tpu_custom_call.1']
    #allocation8 [shape = 'u8[8192]{0}', space=vmem, size = 0x2000, scoped, tag = 'input window, operand 2, single buffered']
    #allocation9 [shape = 'u8[8192]{0}', space=vmem, size = 0x2000, scoped, tag = 'input window, operand 3, single buffered']
    #allocation10 [shape = 's32[1]{0}', space=sflag, size = 0x4, scoped, tag = 'scoped memory for tpu_custom_call.1']
    #allocation11 [shape = 'u8[8192]{0}', space=vmem, size = 0x2000, scoped, tag = 'output window, operand 0, single buffered']
    %10 = vsyncpa [#allocation7], 0
    %11 = vsyncpa [#allocation5], 0
    %12 = vsyncpa [#allocation10], 0
    %13 = vsyncpa [#allocation6], 0
    // Predicated region
    $region2: #{tpu_custom_call.1} parent=1 // pred_check
      _
    $region3: #{tpu_custom_call.1} parent=1 // pred_check_branch
      %15 = sbr.rel (0) target = $region5
    $region4: #{tpu_custom_call.1} parent=1 // pred_region
      %s17 = ssub.s32 16, 16
      %18 = vsyncadd [#allocation7], %s17
      %s20 = sshll.u32 %s0, 4
      %s21 = int_to_ptr.vmem [resolvable:$true] %s20
      %23 = dma.vmem_to_smem %s21, 16, [#allocation4], [#allocation7]
    $region5: #{tpu_custom_call.1} parent=1 // pred_fallthru
      _
    // Predicated region
    $region6: #{tpu_custom_call.1} parent=1 // pred_check
      _
    $region7: #{tpu_custom_call.1} parent=1 // pred_check_branch
      %25 = sbr.rel (0) target = $region9
    $region8: #{tpu_custom_call.1} parent=1 // pred_region
      _
    $region9: #{tpu_custom_call.1} parent=1 // pred_fallthru
      _
    // Predicated region
    $region10: #{tpu_custom_call.1} parent=1 // pred_check
      _
    $region11: #{tpu_custom_call.1} parent=1 // pred_check_branch
      %27 = sbr.rel (0) target = $region13
    $region12: #{tpu_custom_call.1} parent=1 // pred_region
      %s28 = sadd.s32 0, 0
      %p29 = scmp.lt.s32.totalorder %s28, 0
      %s30 = scalar_select %p29, %s28, 0
      %s31 = smul.u32 2, %s30
      %s33 = ssub.s32 256, 256
      %34 = vsyncadd [#allocation5], %s33
      %s35 = smul.addr %s31, 128
      %s36 = scalar_lea.hbm %s2, %s35
      %s37 = sshll.u32 [#allocation8], 4
      %s38 = int_to_ptr.vmem [resolvable:$true] %s37
      %43 = dma.hbm_to_vmem [thread:$0]  %s36, 256, %s38, [#allocation5], 128, 128, 8
    $region13: #{tpu_custom_call.1} parent=1 // pred_fallthru
      _
    // Predicated region
    $region14: #{tpu_custom_call.1} parent=1 // pred_check
      _
    $region15: #{tpu_custom_call.1} parent=1 // pred_check_branch
      %45 = sbr.rel (0) target = $region17
    $region16: #{tpu_custom_call.1} parent=1 // pred_region
      %s46 = sadd.s32 0, 0
      %p47 = scmp.lt.s32.totalorder %s46, 0
      %s48 = scalar_select %p47, %s46, 0
      %s49 = smul.u32 2, %s48
      %s51 = ssub.s32 256, 256
      %52 = vsyncadd [#allocation10], %s51
      %s53 = smul.addr %s49, 128
      %s54 = scalar_lea.hbm %s3, %s53
      %s55 = sshll.u32 [#allocation9], 4
      %s56 = int_to_ptr.vmem [resolvable:$true] %s55
      %61 = dma.hbm_to_vmem [thread:$0]  %s54, 256, %s56, [#allocation10], 128, 128, 8
    $region17: #{tpu_custom_call.1} parent=1 // pred_fallthru
      _
    // Predicated region
    $region18: #{tpu_custom_call.1} parent=1 // pred_check
      _
    $region19: #{tpu_custom_call.1} parent=1 // pred_check_branch
      %63 = sbr.rel (0) target = $region21
    $region20: #{tpu_custom_call.1} parent=1 // pred_region
      %64 = dma.done [#allocation7], 16
    $region21: #{tpu_custom_call.1} parent=1 // pred_fallthru
      _
    // Predicated region
    $region22: #{tpu_custom_call.1} parent=1 // pred_check
      _
    $region23: #{tpu_custom_call.1} parent=1 // pred_check_branch
      %66 = sbr.rel (0) target = $region25
    $region24: #{tpu_custom_call.1} parent=1 // pred_region
      %67 = dma.done [#allocation5], 256
    $region25: #{tpu_custom_call.1} parent=1 // pred_fallthru
      _
    // Predicated region
    $region26: #{tpu_custom_call.1} parent=1 // pred_check
      _
    $region27: #{tpu_custom_call.1} parent=1 // pred_check_branch
      %69 = sbr.rel (0) target = $region29
    $region28: #{tpu_custom_call.1} parent=1 // pred_region
      %70 = dma.done [#allocation10], 256
    $region29: #{tpu_custom_call.1} parent=1 // pred_fallthru
      _
    %71 = sfence
    %s72 = sadd.s32 0, 0
    %p73 = scmp.lt.s32.totalorder %s72, 0
    %s74 = scalar_select %p73, %s72, 0
    %s75 = smul.u32 2, %s74
    %s76 = sadd.s32 0, 0
    %p77 = scmp.lt.s32.totalorder %s76, 0
    %s78 = scalar_select %p77, %s76, 0
    %s79 = smul.u32 2, %s78
    %p80 = scmp.eq.s32.totalorder 0, 0
    // Predicated region
    $region30: #{tpu_custom_call.1} parent=1 // pred_check
      %p81 = pneg %p80
    $region31: #{tpu_custom_call.1} parent=1 // pred_check_branch
      %83 = sbr.rel (%p81) target = $region33
    $region32: #{tpu_custom_call.1} parent=1 // pred_region
      %84 = vst [vmem:[#allocation2] sm:$0xff] 0.0
      %85 = vst [vmem:[#allocation2 + $0x8] sm:$0xff] 0.0
    $region33: #{tpu_custom_call.1} parent=1 // pred_fallthru
      _
    %s86 = sld [smem:[#allocation4]]
    %s87 = sld [smem:[#allocation4 + $0x1]]
    %s88 = sld [smem:[#allocation4 + $0x2]]
    %s89 = sadd.s32 0, 0
    %s90 = sld [smem:[#allocation3]]
    %s91 = smul.u32 %s89, 16
    %s92 = ssub.s32 %s90, %s91
    %p93 = scmp.ge.s32.totalorder %s92, 16
    // Predicated region
    $region34: #{tpu_custom_call.1} parent=1 // pred_check
      %p94 = pneg %p93
    $region35: #{tpu_custom_call.1} parent=1 // pred_check_branch
      %96 = sbr.rel (%p94) target = $region37
    $region36: #{tpu_custom_call.1} parent=1 // pred_region
      %v97 = vld [vmem:[#allocation2] sm:$0xff]
      %v98 = vld [vmem:[#allocation2 + $0x8] sm:$0xff]
      %v99 = vld [vmem:[#allocation8] sm:$0xff]
      %v100 = vld [vmem:[#allocation8 + $0x8] sm:$0xff]
      %v101 = vld [vmem:[#allocation9] sm:$0xff]
      %v102 = vld [vmem:[#allocation9 + $0x8] sm:$0xff]
      %v103 = vsub.f32 %v99, %v101
      %v104 = vsub.f32 %v100, %v102
      %v105 = vand.u32 2147483647, %v103
      %v106 = vand.u32 2147483647, %v104
      %v107 = vstv %s86
      %vm108 = vcmp.ge.f32.partialorder %v105, %v107
      %vm109 = vcmp.ge.f32.partialorder %v106, %v107
      %v110 = vmul.f32 %v103, %v103
      %v111 = vmul.f32 %v104, %v104
      %v112 = vstv %s87
      %v113 = vmul.f32 %v110, %v112
      %v114 = vmul.f32 %v111, %v112
      %v115 = vstv %s88
      %v116 = vadd.f32 %v113, %v115
      %v117 = vadd.f32 %v114, %v115
      %v118 = vsel %vm108, %v105, %v116
      %v119 = vsel %vm109, %v106, %v117
      %v120 = vadd.f32 %v118, 0.0
      %v121 = vadd.f32 %v119, 0.0
      %v122 = vadd.f32 %v97, %v120
      %v123 = vadd.f32 %v98, %v121
      %124 = vst [vmem:[#allocation2] sm:$0xff] %v122
      %125 = vst [vmem:[#allocation2 + $0x8] sm:$0xff] %v123
    $region37: #{tpu_custom_call.1} parent=1 // pred_fallthru
      _
    %p126 = scmp.lt.s32.totalorder %s92, 16
    // Predicated region
    $region38: #{tpu_custom_call.1} parent=1 // pred_check
      %p127 = pneg %p126
    $region39: #{tpu_custom_call.1} parent=1 // pred_check_branch
      %129 = sbr.rel (%p127) target = $region41
    $region40: #{tpu_custom_call.1} parent=1 // pred_region
      %v130 = vlaneseq
      %v131 = vshrl.u32 %v130, 7
      %v132 = vadd.s32 %v131, 8
      %v133 = vld [vmem:[#allocation2] sm:$0xff]
      %v134 = vld [vmem:[#allocation2 + $0x8] sm:$0xff]
      %v135 = vstv %s92
      %vm136 = vcmp.lt.s32.totalorder %v131, %v135
      %vm137 = vcmp.lt.s32.totalorder %v132, %v135
      %v138 = vld [vmem:[#allocation8] sm:$0xff]
      %v139 = vld [vmem:[#allocation8 + $0x8] sm:$0xff]
      %v140 = vld [vmem:[#allocation9] sm:$0xff]
      %v141 = vld [vmem:[#allocation9 + $0x8] sm:$0xff]
      %v142 = vsub.f32 %v138, %v140
      %v143 = vsub.f32 %v139, %v141
      %v144 = vand.u32 2147483647, %v142
      %v145 = vand.u32 2147483647, %v143
      %v146 = vstv %s86
      %vm147 = vcmp.ge.f32.partialorder %v144, %v146
      %vm148 = vcmp.ge.f32.partialorder %v145, %v146
      %v149 = vmul.f32 %v142, %v142
      %v150 = vmul.f32 %v143, %v143
      %v151 = vstv %s87
      %v152 = vmul.f32 %v149, %v151
      %v153 = vmul.f32 %v150, %v151
      %v154 = vstv %s88
      %v155 = vadd.f32 %v152, %v154
      %v156 = vadd.f32 %v153, %v154
      %v157 = vsel %vm147, %v144, %v155
      %v158 = vsel %vm148, %v145, %v156
      %v159 = vsel %vm136, 1, 0
      %v160 = vsel %vm137, 1, 0
      %vm161 = vcmp.eq.s32.totalorder %v159, 1
      %vm162 = vcmp.eq.s32.totalorder %v160, 1
      %v163 = vsel %vm161, %v157, 0.0
      %v164 = vsel %vm162, %v158, 0.0
      %v165 = vadd.f32 %v163, 0.0
      %v166 = vadd.f32 %v164, 0.0
      %v167 = vadd.f32 %v133, %v165
      %v168 = vadd.f32 %v134, %v166
      %169 = vst [vmem:[#allocation2] sm:$0xff] %v167
      %170 = vst [vmem:[#allocation2 + $0x8] sm:$0xff] %v168
    $region41: #{tpu_custom_call.1} parent=1 // pred_fallthru
      _
    // Predicated region
    $region42: #{tpu_custom_call.1} parent=1 // pred_check
      %p171 = pneg %p80
    $region43: #{tpu_custom_call.1} parent=1 // pred_check_branch
      %173 = sbr.rel (%p171) target = $region45
    $region44: #{tpu_custom_call.1} parent=1 // pred_region
      %v174 = vld [vmem:[#allocation2] sm:$0xff]
      %v175 = vld [vmem:[#allocation2 + $0x8] sm:$0xff]
      %176 = vst [vmem:[#allocation11] sm:$0xff] %v174
      %177 = vst [vmem:[#allocation11 + $0x8] sm:$0xff] %v175
    $region45: #{tpu_custom_call.1} parent=1 // pred_fallthru
      _
    // Predicated region
    $region46: #{tpu_custom_call.1} parent=1 // pred_check
      _
    $region47: #{tpu_custom_call.1} parent=1 // pred_check_branch
      %179 = sbr.rel (0) target = $region49
    $region48: #{tpu_custom_call.1} parent=1 // pred_region
      %s181 = ssub.s32 256, 256
      %182 = vsyncadd [#allocation6], %s181
      %s183 = sshll.u32 [#allocation11], 4
      %s184 = int_to_ptr.vmem [resolvable:$true] %s183
      %189 = dma.vmem_to_hbm [thread:$0]  %s184, 256, %s4, [#allocation6], 128, 128, 8
    $region49: #{tpu_custom_call.1} parent=1 // pred_fallthru
      _
    // Predicated region
    $region50: #{tpu_custom_call.1} parent=1 // pred_check
      _
    $region51: #{tpu_custom_call.1} parent=1 // pred_check_branch
      %191 = sbr.rel (0) target = $region53
    $region52: #{tpu_custom_call.1} parent=1 // pred_region
      %192 = dma.done [#allocation6], 256
    $region53: #{tpu_custom_call.1} parent=1 // pred_fallthru
      _
    %193 = vsyncpa [#allocation5], 1
    %194 = vsyncpa [#allocation10], 1
    %195 = vsyncpa [#allocation6], 1
    %196 = vsyncpa [#allocation7], 1

</llo_original>
